<compile_context>
chip_gen: v5e
topology: v5e:2x2
jax: 0.10.0
libtpu: 0.0.40
codegen_flags: <defaults>
</compile_context>

<pallas_src>
import jax
import jax.numpy as jnp
from jax.experimental import pallas as pl
from jax.experimental.pallas import tpu as pltpu


def _points_obj_cls_kernel(x_ref, w0_ref, t0_ref, w1_ref, t1_ref, w2_ref,
                           b2_ref, o_ref):
    """Fused 3-layer pointwise MLP; batch merged into lanes inside the kernel.

    x_ref : (B, C, tn) f32   activations (tile of num_seed on lanes)
    w0/w1 : (C, C)           conv weights with BN scale pre-folded
    t0/t1 : (C, 1) f32       folded BN shift (lane broadcast)
    w2    : (1, C)           final conv weight row
    b2_ref: (1,)  f32 SMEM   final conv bias (scalar)
    o_ref : (B, 1, tn) f32   objectness logits tile
    """
    B, _, tn = x_ref.shape
    cdt = w0_ref.dtype
    # Merge batch into lanes: (B, C, tn) -> (C, B*tn). tn is either the full N
    # or a multiple of 128, so each batch block lands on lane-tile boundaries
    # (cheap VMEM copy) and every matmul below is a single wide MXU pass.
    x = jnp.concatenate([x_ref[b] for b in range(B)], axis=-1).astype(cdt)

    h = jnp.dot(w0_ref[...], x, preferred_element_type=jnp.float32) + t0_ref[...]
    h = jnp.maximum(h, 0.0)
    h = jnp.dot(w1_ref[...], h.astype(cdt),
                preferred_element_type=jnp.float32) + t1_ref[...]
    h = jnp.maximum(h, 0.0)
    o = jnp.dot(w2_ref[...], h.astype(cdt),
                preferred_element_type=jnp.float32) + b2_ref[0]   # (1, B*tn)

    # Split back to (B, 1, tn); each slice starts on a lane-tile boundary and
    # is a full-width lane-dense store.
    for b in range(B):
        o_ref[b] = o[:, b * tn:(b + 1) * tn]


def fold_params(params, *, use_bf16=True):
    """Fold inference-mode BN into the conv weights ONCE (off the hot path).

    BN(W x + b) = (s*W) x + ((b - rm)*s + be),   s = g / sqrt(rv + eps)
    Returns (w0f, t0, w1f, t1, w2f, b2s) ready for points_obj_cls_forward.
    """
    (w0, b0, g0, be0, rm0, rv0,
     w1, b1, g1, be1, rm1, rv1,
     w2, b2, eps) = params

    s0 = g0 / jnp.sqrt(rv0 + eps)
    s1 = g1 / jnp.sqrt(rv1 + eps)
    cdt = jnp.bfloat16 if use_bf16 else jnp.float32
    # NOTE: casting BN-scaled weights to bf16 can amplify rounding when s is
    # large; accumulation and the per-channel shifts stay f32.
    w0f = (w0 * s0[:, None]).astype(cdt)                          # (C, C)
    w1f = (w1 * s1[:, None]).astype(cdt)                          # (C, C)
    t0 = ((b0 - rm0) * s0 + be0)[:, None].astype(jnp.float32)     # (C, 1)
    t1 = ((b1 - rm1) * s1 + be1)[:, None].astype(jnp.float32)     # (C, 1)
    w2f = w2.astype(cdt)                                          # (1, C)
    b2s = b2.reshape(1).astype(jnp.float32)                       # SMEM scalar
    return (w0f, t0, w1f, t1, w2f, b2s)


def _choose_n_tile(N):
    # Single invocation for small problems; >=512-lane tiles for large N so the
    # "parallel" grid can spread across v7x's two TensorCores while the
    # double-buffered per-step working set stays far below v7x's 64 MiB VMEM.
    if N <= 1024:
        return N
    for tn in (2048, 1024, 512):
        if N % tn == 0:
            return tn
    return N  # TODO(synk): pad ragged N to a multiple of 512 before tiling.


def points_obj_cls_forward(seed_features, folded_params):
    """seed_features: (B, C, N) float32 -> objectness logits (B, 1, N) float32."""
    B, C, N = seed_features.shape
    w0f, t0, w1f, t1, w2f, b2s = folded_params

    tn = _choose_n_tile(N)
    grid = (N // tn,)
    full = lambda i: (0, 0)

    return pl.pallas_call(
        _points_obj_cls_kernel,
        out_shape=jax.ShapeDtypeStruct((B, 1, N), jnp.float32),
        grid=grid,
        in_specs=[
            pl.BlockSpec((B, C, tn), lambda i: (0, 0, i)),        # activations (f32)
            pl.BlockSpec((C, C), full),                           # w0 (BN folded)
            pl.BlockSpec((C, 1), full),                           # t0
            pl.BlockSpec((C, C), full),                           # w1 (BN folded)
            pl.BlockSpec((C, 1), full),                           # t1
            pl.BlockSpec((1, C), full),                           # w2
            pl.BlockSpec(memory_space=pltpu.MemorySpace.SMEM),    # b2 (scalar)
        ],
        out_specs=pl.BlockSpec((B, 1, tn), lambda i: (0, 0, i)),
        compiler_params=pltpu.CompilerParams(
            dimension_semantics=("parallel",)),
    )(seed_features, w0f, t0, w1f, t1, w2f, b2s)


def init_params(key, in_channel, eps=1e-5):
    """Deterministic synthetic module params (raw, unfolded)."""
    C = in_channel
    ks = jax.random.split(key, 14)

    def conv_w(k, co, ci):
        return 0.1 * jax.random.normal(k, (co, ci), jnp.float32)

    def conv_b(k, co):
        return 0.05 * jax.random.normal(k, (co,), jnp.float32)

    # layer0: Conv1d(C, C, 1) + BN1d(C) + ReLU
    w0 = conv_w(ks[0], C, C); b0 = conv_b(ks[1], C)
    g0 = 1.0 + 0.1 * jax.random.normal(ks[2], (C,), jnp.float32)
    be0 = 0.1 * jax.random.normal(ks[3], (C,), jnp.float32)
    rm0 = 0.1 * jax.random.normal(ks[4], (C,), jnp.float32)
    rv0 = jnp.abs(1.0 + 0.1 * jax.random.normal(ks[5], (C,), jnp.float32))
    # layer1: Conv1d(C, C, 1) + BN1d(C) + ReLU
    w1 = conv_w(ks[6], C, C); b1 = conv_b(ks[7], C)
    g1 = 1.0 + 0.1 * jax.random.normal(ks[8], (C,), jnp.float32)
    be1 = 0.1 * jax.random.normal(ks[9], (C,), jnp.float32)
    rm1 = 0.1 * jax.random.normal(ks[10], (C,), jnp.float32)
    rv1 = jnp.abs(1.0 + 0.1 * jax.random.normal(ks[11], (C,), jnp.float32))
    # layer2: Conv1d(C, 1, 1), no norm / act
    w2 = conv_w(ks[12], 1, C); b2 = conv_b(ks[13], 1)

    return (w0, b0, g0, be0, rm0, rv0,
            w1, b1, g1, be1, rm1, rv1,
            w2, b2, eps)


def reference_forward(seed_features, params):
    """Pure-JAX reference of the PyTorch module (Conv1d k=1 + BN1d + ReLU x2, Conv1d)."""
    (w0, b0, g0, be0, rm0, rv0,
     w1, b1, g1, be1, rm1, rv1,
     w2, b2, eps) = params

    def conv1x1(x, w, b):
        return jnp.einsum('oc,bcn->bon', w, x) + b[None, :, None]

    def bn(y, g, be, rm, rv):
        s = g / jnp.sqrt(rv + eps)
        return (y - rm[None, :, None]) * s[None, :, None] + be[None, :, None]

    h = jax.nn.relu(bn(conv1x1(seed_features, w0, b0), g0, be0, rm0, rv0))
    h = jax.nn.relu(bn(conv1x1(h, w1, b1), g1, be1, rm1, rv1))
    return conv1x1(h, w2, b2)                                   # (B, 1, N)


if __name__ == "__main__":
    B, C, N = 2, 32, 256  # batch, in_channel (feature_dim), num_seed

    key = jax.random.PRNGKey(0)
    k_x, k_p = jax.random.split(key)
    seed_features = jax.random.normal(k_x, (B, C, N), jnp.float32)
    params = init_params(k_p, C)

    ref = reference_forward(seed_features, params)
    fwd = jax.jit(points_obj_cls_forward)

    # Default path: bf16 MXU operands, f32 accumulation/elementwise.
    folded_bf16 = fold_params(params)                 # folded ONCE, off hot path
    out = jax.block_until_ready(fwd(seed_features, folded_bf16))
    assert out.shape == (B, 1, N), out.shape
    assert jnp.allclose(out, ref, atol=5e-2, rtol=5e-2), "bf16 mismatch vs reference"

    # Full-f32 MXU path (tight tolerance).
    folded_f32 = fold_params(params, use_bf16=False)
    out_f32 = jax.block_until_ready(fwd(seed_features, folded_f32))
    assert out_f32.shape == (B, 1, N), out_f32.shape
    assert jnp.allclose(out_f32, ref, atol=1e-4, rtol=1e-4), "f32 mismatch vs reference"

    print("KERNEL_OK")
</pallas_src>

<mosaic_0001>
module attributes {stable_mosaic.version = 11 : i64} {
  func.func @_points_obj_cls_kernel(%arg0: i32, %arg1: memref<2x32x256xf32, #tpu.memory_space<vmem>>, %arg2: memref<32x32xbf16, #tpu.memory_space<vmem>>, %arg3: memref<32x1xf32, #tpu.memory_space<vmem>>, %arg4: memref<32x32xbf16, #tpu.memory_space<vmem>>, %arg5: memref<32x1xf32, #tpu.memory_space<vmem>>, %arg6: memref<1x32xbf16, #tpu.memory_space<vmem>>, %arg7: memref<1xf32, #tpu.memory_space<smem>>, %arg8: memref<2x1x256xf32, #tpu.memory_space<vmem>>) attributes {dimension_semantics = [#tpu.dimension_semantics<parallel>], iteration_bounds = array<i64: 1>, scalar_prefetch = 0 : i64, scratch_operands = 0 : i64, tpu.core_type = #tpu.core_type<tc>, window_params = [{transform_indices = @transform_0, window_bounds = array<i64: 2, 32, 256>}, {pipeline_mode = #tpu.pipeline_mode<synchronous>, transform_indices = @transform_1, window_bounds = array<i64: 32, 32>}, {pipeline_mode = #tpu.pipeline_mode<synchronous>, transform_indices = @transform_2, window_bounds = array<i64: 32, 1>}, {pipeline_mode = #tpu.pipeline_mode<synchronous>, transform_indices = @transform_3, window_bounds = array<i64: 32, 32>}, {pipeline_mode = #tpu.pipeline_mode<synchronous>, transform_indices = @transform_4, window_bounds = array<i64: 32, 1>}, {pipeline_mode = #tpu.pipeline_mode<synchronous>, transform_indices = @transform_5, window_bounds = array<i64: 1, 32>}, {transform_indices = @transform_6, window_bounds = array<i64: 1>}, {transform_indices = @transform_7, window_bounds = array<i64: 2, 1, 256>}]} {
    %c0 = arith.constant 0 : index
    %c0_0 = arith.constant 0 : index
    %c0_1 = arith.constant 0 : index
    %0 = vector.load %arg1[%c0, %c0_0, %c0_1] : memref<2x32x256xf32, #tpu.memory_space<vmem>>, vector<1x32x256xf32>
    %1 = vector.shape_cast %0 : vector<1x32x256xf32> to vector<32x256xf32>
    %c1 = arith.constant 1 : index
    %c0_2 = arith.constant 0 : index
    %c0_3 = arith.constant 0 : index
    %2 = vector.load %arg1[%c1, %c0_2, %c0_3] : memref<2x32x256xf32, #tpu.memory_space<vmem>>, vector<1x32x256xf32>
    %3 = vector.shape_cast %2 : vector<1x32x256xf32> to vector<32x256xf32>
    %4 = tpu.concatenate %1, %3 in 1 : vector<32x256xf32>, vector<32x256xf32> -> vector<32x512xf32>
    %5 = arith.truncf %4 : vector<32x512xf32> to vector<32x512xbf16>
    %c0_4 = arith.constant 0 : index
    %c0_5 = arith.constant 0 : index
    %6 = vector.load %arg2[%c0_4, %c0_5] : memref<32x32xbf16, #tpu.memory_space<vmem>>, vector<32x32xbf16>
    %cst = arith.constant dense<0.000000e+00> : vector<32x512xf32>
    %7 = tpu.matmul %6, %5, %cst {dimension_numbers = #tpu.dot_dimension_numbers<[1], [0], [0], [1], [0, 0, 1, 1], [], []>} : vector<32x32xbf16>, vector<32x512xbf16>, vector<32x512xf32> -> vector<32x512xf32>
    %c0_6 = arith.constant 0 : index
    %c0_7 = arith.constant 0 : index
    %8 = vector.load %arg3[%c0_6, %c0_7] : memref<32x1xf32, #tpu.memory_space<vmem>>, vector<32x1xf32>
    %9 = vector.broadcast %8 : vector<32x1xf32> to vector<32x512xf32>
    %10 = arith.addf %7, %9 : vector<32x512xf32>
    %cst_8 = arith.constant 0.000000e+00 : f32
    %11 = vector.broadcast %cst_8 : f32 to vector<32x512xf32>
    %12 = arith.maximumf %10, %11 : vector<32x512xf32>
    %c0_9 = arith.constant 0 : index
    %c0_10 = arith.constant 0 : index
    %13 = vector.load %arg4[%c0_9, %c0_10] : memref<32x32xbf16, #tpu.memory_space<vmem>>, vector<32x32xbf16>
    %14 = arith.truncf %12 : vector<32x512xf32> to vector<32x512xbf16>
    %cst_11 = arith.constant dense<0.000000e+00> : vector<32x512xf32>
    %15 = tpu.matmul %13, %14, %cst_11 {dimension_numbers = #tpu.dot_dimension_numbers<[1], [0], [0], [1], [0, 0, 1, 1], [], []>} : vector<32x32xbf16>, vector<32x512xbf16>, vector<32x512xf32> -> vector<32x512xf32>
    %c0_12 = arith.constant 0 : index
    %c0_13 = arith.constant 0 : index
    %16 = vector.load %arg5[%c0_12, %c0_13] : memref<32x1xf32, #tpu.memory_space<vmem>>, vector<32x1xf32>
    %17 = vector.broadcast %16 : vector<32x1xf32> to vector<32x512xf32>
    %18 = arith.addf %15, %17 : vector<32x512xf32>
    %cst_14 = arith.constant 0.000000e+00 : f32
    %19 = vector.broadcast %cst_14 : f32 to vector<32x512xf32>
    %20 = arith.maximumf %18, %19 : vector<32x512xf32>
    %c0_15 = arith.constant 0 : index
    %c0_16 = arith.constant 0 : index
    %21 = vector.load %arg6[%c0_15, %c0_16] : memref<1x32xbf16, #tpu.memory_space<vmem>>, vector<1x32xbf16>
    %22 = arith.truncf %20 : vector<32x512xf32> to vector<32x512xbf16>
    %cst_17 = arith.constant dense<0.000000e+00> : vector<1x512xf32>
    %23 = tpu.matmul %21, %22, %cst_17 {dimension_numbers = #tpu.dot_dimension_numbers<[1], [0], [0], [1], [0, 0, 1, 1], [], []>} : vector<1x32xbf16>, vector<32x512xbf16>, vector<1x512xf32> -> vector<1x512xf32>
    %c0_18 = arith.constant 0 : index
    %24 = memref.load %arg7[%c0_18] : memref<1xf32, #tpu.memory_space<smem>>
    %25 = vector.broadcast %24 : f32 to vector<1x512xf32>
    %26 = arith.addf %23, %25 : vector<1x512xf32>
    %27 = vector.extract_strided_slice %26 {offsets = [0, 0], sizes = [1, 256], strides = [1, 1]} : vector<1x512xf32> to vector<1x256xf32>
    %c0_19 = arith.constant 0 : index
    %c0_20 = arith.constant 0 : index
    %c0_21 = arith.constant 0 : index
    %28 = vector.load %arg8[%c0_19, %c0_20, %c0_21] : memref<2x1x256xf32, #tpu.memory_space<vmem>>, vector<1x1x256xf32>
    %29 = vector.shape_cast %28 : vector<1x1x256xf32> to vector<1x256xf32>
    %30 = vector.shape_cast %27 : vector<1x256xf32> to vector<1x1x256xf32>
    tpu.vector_store %arg8[%c0_19, %c0_20, %c0_21], %30 {strides = array<i32>} : memref<2x1x256xf32, #tpu.memory_space<vmem>>, vector<1x1x256xf32>,
    %31 = vector.extract_strided_slice %26 {offsets = [0, 256], sizes = [1, 256], strides = [1, 1]} : vector<1x512xf32> to vector<1x256xf32>
    %c1_22 = arith.constant 1 : index
    %c0_23 = arith.constant 0 : index
    %c0_24 = arith.constant 0 : index
    %32 = vector.load %arg8[%c1_22, %c0_23, %c0_24] : memref<2x1x256xf32, #tpu.memory_space<vmem>>, vector<1x1x256xf32>
    %33 = vector.shape_cast %32 : vector<1x1x256xf32> to vector<1x256xf32>
    %34 = vector.shape_cast %31 : vector<1x256xf32> to vector<1x1x256xf32>
    tpu.vector_store %arg8[%c1_22, %c0_23, %c0_24], %34 {strides = array<i32>} : memref<2x1x256xf32, #tpu.memory_space<vmem>>, vector<1x1x256xf32>,
    return
  }
  func.func @transform_0(%arg0: i32) -> (i32, i32, i32) {
    %c0_i32 = arith.constant 0 : i32
    %c0_i32_0 = arith.constant 0 : i32
    %c0_i32_1 = arith.constant 0 : i32
    return %c0_i32, %c0_i32_0, %arg0 : i32, i32, i32
  }
  func.func @transform_1(%arg0: i32) -> (i32, i32) {
    %c0_i32 = arith.constant 0 : i32
    %c0_i32_0 = arith.constant 0 : i32
    %c0_i32_1 = arith.constant 0 : i32
    return %c0_i32, %c0_i32_0 : i32, i32
  }
  func.func @transform_2(%arg0: i32) -> (i32, i32) {
    %c0_i32 = arith.constant 0 : i32
    %c0_i32_0 = arith.constant 0 : i32
    %c0_i32_1 = arith.constant 0 : i32
    return %c0_i32, %c0_i32_0 : i32, i32
  }
  func.func @transform_3(%arg0: i32) -> (i32, i32) {
    %c0_i32 = arith.constant 0 : i32
    %c0_i32_0 = arith.constant 0 : i32
    %c0_i32_1 = arith.constant 0 : i32
    return %c0_i32, %c0_i32_0 : i32, i32
  }
  func.func @transform_4(%arg0: i32) -> (i32, i32) {
    %c0_i32 = arith.constant 0 : i32
    %c0_i32_0 = arith.constant 0 : i32
    %c0_i32_1 = arith.constant 0 : i32
    return %c0_i32, %c0_i32_0 : i32, i32
  }
  func.func @transform_5(%arg0: i32) -> (i32, i32) {
    %c0_i32 = arith.constant 0 : i32
    %c0_i32_0 = arith.constant 0 : i32
    %c0_i32_1 = arith.constant 0 : i32
    return %c0_i32, %c0_i32_0 : i32, i32
  }
  func.func @transform_6(%arg0: i32) -> i32 {
    %c0_i32 = arith.constant 0 : i32
    %c0_i32_0 = arith.constant 0 : i32
    return %c0_i32 : i32
  }
  func.func @transform_7(%arg0: i32) -> (i32, i32, i32) {
    %c0_i32 = arith.constant 0 : i32
    %c0_i32_0 = arith.constant 0 : i32
    %c0_i32_1 = arith.constant 0 : i32
    return %c0_i32, %c0_i32_0, %arg0 : i32, i32, i32
  }
}

</mosaic_0001>

<llo_original>
// kernel: points_obj_cls_forward.1
$region0: #{points_obj_cls_forward.1}
  #allocation0 [shape = 'u32[]', space=smem, size = 0x4, offset = 0x4, fixed_abs, tag = 'smem constant byte address 0x4 - core index']
  #allocation1 [shape = 'u32[72,128]{1,0:T(1,128)}', space=vmem, size = 0x9000, scoped, tag = 'internal scratch']
  #allocation2 [shape = 'f32[1]{0:T(128)S(6)}', space=smem, size = 0x200, scoped, tag = 'scoped memory for points_obj_cls_forward.1']
  %s0 = inlined_call_operand.hbm [shape: f32[2,32,256], index: 0, kind: input, shape index: {}]
  %s1 = inlined_call_operand.vmem [shape: bf16[32,32], index: 1, kind: input, shape index: {}]
  %s2 = inlined_call_operand.vmem [shape: f32[32,1], index: 2, kind: input, shape index: {}]
  %s3 = inlined_call_operand.vmem [shape: bf16[32,32], index: 3, kind: input, shape index: {}]
  %s4 = inlined_call_operand.vmem [shape: f32[32,1], index: 4, kind: input, shape index: {}]
  %s5 = inlined_call_operand.vmem [shape: bf16[1,32], index: 5, kind: input, shape index: {}]
  %s6 = inlined_call_operand.<no memory space> [shape: f32[1], index: 6, kind: input, shape index: {}]
  %s7 = inlined_call_operand.hbm [shape: f32[2,1,256], index: 7, kind: output, shape index: {}]
  %s8 = sld [smem:[#allocation0]]
  $region42: #{points_obj_cls_forward.1} parent=0
    _
  %s10 = ssub.s32 1, %s8
  %s11 = scalar_select 0, %s10, %s8
  %12 = sst [smem:[#allocation2]] %s6
  $region1: #{points_obj_cls_forward.1} parent=0
    #allocation3 [shape = 'u8[65536]{0}', space=vmem, size = 0x10000, scoped, tag = 'input window, operand 0, single buffered']
    #allocation4 [shape = 's32[1]{0}', space=sflag, size = 0x4, scoped, tag = 'scoped memory for points_obj_cls_forward.1']
    #allocation5 [shape = 's32[1]{0}', space=sflag, size = 0x4, scoped, tag = 'scoped memory for points_obj_cls_forward.1']
    #allocation6 [shape = 'u8[2048]{0}', space=vmem, size = 0x800, scoped, tag = 'output window, operand 0, single buffered']
    %13 = vsyncpa [#allocation4], 0
    %14 = vsyncpa [#allocation5], 0
    // Predicated region
    $region2: #{points_obj_cls_forward.1} parent=1 // pred_check
      _
    $region3: #{points_obj_cls_forward.1} parent=1 // pred_check_branch
      %16 = sbr.rel (0) target = $region5
    $region4: #{points_obj_cls_forward.1} parent=1 // pred_region
      %18 = vsyncadd [#allocation4], 0
      %s19 = sshll.u32 %s0, 4
      %s20 = int_to_ptr.hbm [resolvable:$true] %s19
      %s21 = sshll.u32 [#allocation3], 4
      %s22 = int_to_ptr.vmem [resolvable:$true] %s21
      %27 = dma.hbm_to_vmem [thread:$0]  %s20, 2048, %s22, [#allocation4], 256, 256, 16
    $region5: #{points_obj_cls_forward.1} parent=1 // pred_fallthru
      _
    // Predicated region
    $region6: #{points_obj_cls_forward.1} parent=1 // pred_check
      _
    $region7: #{points_obj_cls_forward.1} parent=1 // pred_check_branch
      %29 = sbr.rel (0) target = $region9
    $region8: #{points_obj_cls_forward.1} parent=1 // pred_region
      _
    $region9: #{points_obj_cls_forward.1} parent=1 // pred_fallthru
      _
    // Predicated region
    $region10: #{points_obj_cls_forward.1} parent=1 // pred_check
      _
    $region11: #{points_obj_cls_forward.1} parent=1 // pred_check_branch
      %31 = sbr.rel (0) target = $region13
    $region12: #{points_obj_cls_forward.1} parent=1 // pred_region
      _
    $region13: #{points_obj_cls_forward.1} parent=1 // pred_fallthru
      _
    // Predicated region
    $region14: #{points_obj_cls_forward.1} parent=1 // pred_check
      _
    $region15: #{points_obj_cls_forward.1} parent=1 // pred_check_branch
      %33 = sbr.rel (0) target = $region17
    $region16: #{points_obj_cls_forward.1} parent=1 // pred_region
      _
    $region17: #{points_obj_cls_forward.1} parent=1 // pred_fallthru
      _
    // Predicated region
    $region18: #{points_obj_cls_forward.1} parent=1 // pred_check
      _
    $region19: #{points_obj_cls_forward.1} parent=1 // pred_check_branch
      %35 = sbr.rel (0) target = $region21
    $region20: #{points_obj_cls_forward.1} parent=1 // pred_region
      _
    $region21: #{points_obj_cls_forward.1} parent=1 // pred_fallthru
      _
    // Predicated region
    $region22: #{points_obj_cls_forward.1} parent=1 // pred_check
      _
    $region23: #{points_obj_cls_forward.1} parent=1 // pred_check_branch
      %37 = sbr.rel (0) target = $region25
    $region24: #{points_obj_cls_forward.1} parent=1 // pred_region
      _
    $region25: #{points_obj_cls_forward.1} parent=1 // pred_fallthru
      _
    // Predicated region
    $region26: #{points_obj_cls_forward.1} parent=1 // pred_check
      _
    $region27: #{points_obj_cls_forward.1} parent=1 // pred_check_branch
      %39 = sbr.rel (0) target = $region29
    $region28: #{points_obj_cls_forward.1} parent=1 // pred_region
      _
    $region29: #{points_obj_cls_forward.1} parent=1 // pred_fallthru
      _
    // Predicated region
    $region30: #{points_obj_cls_forward.1} parent=1 // pred_check
      _
    $region31: #{points_obj_cls_forward.1} parent=1 // pred_check_branch
      %41 = sbr.rel (0) target = $region33
    $region32: #{points_obj_cls_forward.1} parent=1 // pred_region
      %43 = dma.done [#allocation4], 2048
    $region33: #{points_obj_cls_forward.1} parent=1 // pred_fallthru
      _
    %v45 = vld [vmem:[#allocation3] sm:$0xff]
    %v46 = vld [vmem:[#allocation3 + $0x8] sm:$0xff]
    %v47 = vld [vmem:[#allocation3 + $0x10] sm:$0xff]
    %v48 = vld [vmem:[#allocation3 + $0x18] sm:$0xff]
    %v49 = vld [vmem:[#allocation3 + $0x20] sm:$0xff]
    %v50 = vld [vmem:[#allocation3 + $0x28] sm:$0xff]
    %v51 = vld [vmem:[#allocation3 + $0x30] sm:$0xff]
    %v52 = vld [vmem:[#allocation3 + $0x38] sm:$0xff]
    %s53 = scalar_lea.vmem [#allocation3], 64
    %v54 = vld [vmem:[%s53] sm:$0xff]
    %v55 = vld [vmem:[%s53 + $0x8] sm:$0xff]
    %v56 = vld [vmem:[%s53 + $0x10] sm:$0xff]
    %v57 = vld [vmem:[%s53 + $0x18] sm:$0xff]
    %v58 = vld [vmem:[%s53 + $0x20] sm:$0xff]
    %v59 = vld [vmem:[%s53 + $0x28] sm:$0xff]
    %v60 = vld [vmem:[%s53 + $0x30] sm:$0xff]
    %v61 = vld [vmem:[%s53 + $0x38] sm:$0xff]
    %v62 = vpack.c.bf16 %v47, %v45
    %v63 = vpack.c.bf16 %v48, %v46
    %v64 = vpack.c.bf16 %v56, %v54
    %v65 = vpack.c.bf16 %v57, %v55
    %v66 = vpack.c.bf16 %v51, %v49
    %v67 = vpack.c.bf16 %v52, %v50
    %v68 = vpack.c.bf16 %v60, %v58
    %v69 = vpack.c.bf16 %v61, %v59
    %v70 = vld [vmem:[%s1] sm:$0xf]
    %v71 = vld [vmem:[%s1 + $0x4] sm:$0xf]
    %v72 = vld [vmem:[%s1 + $0x8] sm:$0xf]
    %v73 = vld [vmem:[%s1 + $0xc] sm:$0xf]
    %v74 = vld [vmem:[%s2] sm:$0xff]
    %v75 = vld [vmem:[%s2 + $0x8] sm:$0xff]
    %v76 = vld [vmem:[%s2 + $0x10] sm:$0xff]
    %v77 = vld [vmem:[%s2 + $0x18] sm:$0xff]
    %79 = vset.pattern.permute.xlu0 0
    %80 = vperm.xlu0 %79, %v74
    %v81 = vpop.permute.xlu0 %80
    %84 = vset.pattern.permute.xlu0 0
    %85 = vperm.xlu0 %84, %v75
    %v86 = vpop.permute.xlu0 %85
    %89 = vset.pattern.permute.xlu0 0
    %90 = vperm.xlu0 %89, %v76
    %v91 = vpop.permute.xlu0 %90
    %94 = vset.pattern.permute.xlu0 0
    %95 = vperm.xlu0 %94, %v77
    %v96 = vpop.permute.xlu0 %95
    %v102 = vunpack.c.l.b16 %v70
    %v103 = vunpack.c.l.b16 %v71
    %v104 = vunpack.c.l.b16 %v72
    %v105 = vunpack.c.l.b16 %v73
    %v106 = vpack.c.b16 %v103, %v102
    %v107 = vpack.c.b16 %v105, %v104
    %vm108 = vcmask 261120
    %v110 = vsel %vm108, %v106, 0
    %v113 = vsel %vm108, %v107, 0
    %115 = vmatpush.bf16.msra.mxu0 0
    %116 = vmatpush.bf16.msra.mxu0 0
    %117 = vmatpush.bf16.msra.mxu0 0
    %118 = vmatpush.bf16.msra.mxu0 0
    %119 = vmatpush.bf16.msra.mxu0 0
    %120 = vmatpush.bf16.msra.mxu0 0
    %121 = vmatpush.bf16.msra.mxu0 %v66
    %122 = vmatpush.bf16.msra.mxu0 %v62
    %123 = vmatmul.bf16.gmra.mxu0 %v110
    %v124 = vpop.f32.mrf.mxu0
    %v125 = vadd.f32 %v81, %v124
    %v126 = vpop.f32.mrf.mxu0
    %v127 = vadd.f32 %v86, %v126
    %128 = vmatmul.bf16.gmra.mxu0 %v113
    %v129 = vpop.f32.mrf.mxu0
    %v130 = vadd.f32 %v91, %v129
    %v131 = vpop.f32.mrf.mxu0
    %v132 = vadd.f32 %v96, %v131
    %133 = vdwg.mxu0
    %134 = vmatpush.bf16.msra.mxu0 0
    %135 = vmatpush.bf16.msra.mxu0 0
    %136 = vmatpush.bf16.msra.mxu0 0
    %137 = vmatpush.bf16.msra.mxu0 0
    %138 = vmatpush.bf16.msra.mxu0 0
    %139 = vmatpush.bf16.msra.mxu0 0
    %140 = vmatpush.bf16.msra.mxu0 %v67
    %141 = vmatpush.bf16.msra.mxu0 %v63
    %142 = vmatmul.bf16.gmra.mxu0 %v110
    %v143 = vpop.f32.mrf.mxu0
    %v144 = vadd.f32 %v81, %v143
    %v145 = vpop.f32.mrf.mxu0
    %v146 = vadd.f32 %v86, %v145
    %147 = vmatmul.bf16.gmra.mxu0 %v113
    %v148 = vpop.f32.mrf.mxu0
    %v149 = vadd.f32 %v91, %v148
    %v150 = vpop.f32.mrf.mxu0
    %v151 = vadd.f32 %v96, %v150
    %152 = vdwg.mxu0
    %153 = vmatpush.bf16.msra.mxu0 0
    %154 = vmatpush.bf16.msra.mxu0 0
    %155 = vmatpush.bf16.msra.mxu0 0
    %156 = vmatpush.bf16.msra.mxu0 0
    %157 = vmatpush.bf16.msra.mxu0 0
    %158 = vmatpush.bf16.msra.mxu0 0
    %159 = vmatpush.bf16.msra.mxu0 %v68
    %160 = vmatpush.bf16.msra.mxu0 %v64
    %161 = vmatmul.bf16.gmra.mxu0 %v110
    %v162 = vpop.f32.mrf.mxu0
    %v163 = vadd.f32 %v81, %v162
    %v164 = vpop.f32.mrf.mxu0
    %v165 = vadd.f32 %v86, %v164
    %166 = vmatmul.bf16.gmra.mxu0 %v113
    %v167 = vpop.f32.mrf.mxu0
    %v168 = vadd.f32 %v91, %v167
    %v169 = vpop.f32.mrf.mxu0
    %v170 = vadd.f32 %v96, %v169
    %171 = vdwg.mxu0
    %172 = vmatpush.bf16.msra.mxu0 0
    %173 = vmatpush.bf16.msra.mxu0 0
    %174 = vmatpush.bf16.msra.mxu0 0
    %175 = vmatpush.bf16.msra.mxu0 0
    %176 = vmatpush.bf16.msra.mxu0 0
    %177 = vmatpush.bf16.msra.mxu0 0
    %178 = vmatpush.bf16.msra.mxu0 %v69
    %179 = vmatpush.bf16.msra.mxu0 %v65
    %180 = vmatmul.bf16.gmra.mxu0 %v110
    %v181 = vpop.f32.mrf.mxu0
    %v182 = vadd.f32 %v81, %v181
    %v183 = vpop.f32.mrf.mxu0
    %v184 = vadd.f32 %v86, %v183
    %185 = vmatmul.bf16.gmra.mxu0 %v113
    %v186 = vpop.f32.mrf.mxu0
    %v187 = vadd.f32 %v91, %v186
    %v188 = vpop.f32.mrf.mxu0
    %v189 = vadd.f32 %v96, %v188
    %190 = vdwg.mxu0
    %v191 = vmax.f32 %v125, 0.0
    %v192 = vmax.f32 %v144, 0.0
    %v193 = vmax.f32 %v163, 0.0
    %v194 = vmax.f32 %v182, 0.0
    %v195 = vmax.f32 %v127, 0.0
    %v196 = vmax.f32 %v146, 0.0
    %v197 = vmax.f32 %v165, 0.0
    %v198 = vmax.f32 %v184, 0.0
    %v199 = vmax.f32 %v130, 0.0
    %v200 = vmax.f32 %v149, 0.0
    %v201 = vmax.f32 %v168, 0.0
    %v202 = vmax.f32 %v187, 0.0
    %v203 = vmax.f32 %v132, 0.0
    %v204 = vmax.f32 %v151, 0.0
    %v205 = vmax.f32 %v170, 0.0
    %v206 = vmax.f32 %v189, 0.0
    %v207 = vld [vmem:[%s3] sm:$0xf]
    %v208 = vld [vmem:[%s3 + $0x4] sm:$0xf]
    %v209 = vld [vmem:[%s3 + $0x8] sm:$0xf]
    %v210 = vld [vmem:[%s3 + $0xc] sm:$0xf]
    %v211 = vpack.c.bf16 %v195, %v191
    %v212 = vpack.c.bf16 %v196, %v192
    %v213 = vpack.c.bf16 %v197, %v193
    %v214 = vpack.c.bf16 %v198, %v194
    %v215 = vpack.c.bf16 %v203, %v199
    %v216 = vpack.c.bf16 %v204, %v200
    %v217 = vpack.c.bf16 %v205, %v201
    %v218 = vpack.c.bf16 %v206, %v202
    %v219 = vld [vmem:[%s4] sm:$0xff]
    %v220 = vld [vmem:[%s4 + $0x8] sm:$0xff]
    %v221 = vld [vmem:[%s4 + $0x10] sm:$0xff]
    %v222 = vld [vmem:[%s4 + $0x18] sm:$0xff]
    %224 = vset.pattern.permute.xlu0 0
    %225 = vperm.xlu0 %224, %v219
    %v226 = vpop.permute.xlu0 %225
    %229 = vset.pattern.permute.xlu0 0
    %230 = vperm.xlu0 %229, %v220
    %v231 = vpop.permute.xlu0 %230
    %234 = vset.pattern.permute.xlu0 0
    %235 = vperm.xlu0 %234, %v221
    %v236 = vpop.permute.xlu0 %235
    %239 = vset.pattern.permute.xlu0 0
    %240 = vperm.xlu0 %239, %v222
    %v241 = vpop.permute.xlu0 %240
    %v247 = vunpack.c.l.b16 %v207
    %v248 = vunpack.c.l.b16 %v208
    %v249 = vunpack.c.l.b16 %v209
    %v250 = vunpack.c.l.b16 %v210
    %v251 = vpack.c.b16 %v248, %v247
    %v252 = vpack.c.b16 %v250, %v249
    %v254 = vsel %vm108, %v251, 0
    %v257 = vsel %vm108, %v252, 0
    %259 = vmatpush.bf16.msra.mxu0 0
    %260 = vmatpush.bf16.msra.mxu0 0
    %261 = vmatpush.bf16.msra.mxu0 0
    %262 = vmatpush.bf16.msra.mxu0 0
    %263 = vmatpush.bf16.msra.mxu0 0
    %264 = vmatpush.bf16.msra.mxu0 0
    %265 = vmatpush.bf16.msra.mxu0 %v215
    %266 = vmatpush.bf16.msra.mxu0 %v211
    %267 = vmatmul.bf16.gmra.mxu0 %v254
    %v268 = vpop.f32.mrf.mxu0
    %v269 = vadd.f32 %v226, %v268
    %v270 = vpop.f32.mrf.mxu0
    %v271 = vadd.f32 %v231, %v270
    %272 = vmatmul.bf16.gmra.mxu0 %v257
    %v273 = vpop.f32.mrf.mxu0
    %v274 = vadd.f32 %v236, %v273
    %v275 = vpop.f32.mrf.mxu0
    %v276 = vadd.f32 %v241, %v275
    %277 = vdwg.mxu0
    %278 = vmatpush.bf16.msra.mxu0 0
    %279 = vmatpush.bf16.msra.mxu0 0
    %280 = vmatpush.bf16.msra.mxu0 0
    %281 = vmatpush.bf16.msra.mxu0 0
    %282 = vmatpush.bf16.msra.mxu0 0
    %283 = vmatpush.bf16.msra.mxu0 0
    %284 = vmatpush.bf16.msra.mxu0 %v216
    %285 = vmatpush.bf16.msra.mxu0 %v212
    %286 = vmatmul.bf16.gmra.mxu0 %v254
    %v287 = vpop.f32.mrf.mxu0
    %v288 = vadd.f32 %v226, %v287
    %v289 = vpop.f32.mrf.mxu0
    %v290 = vadd.f32 %v231, %v289
    %291 = vmatmul.bf16.gmra.mxu0 %v257
    %v292 = vpop.f32.mrf.mxu0
    %v293 = vadd.f32 %v236, %v292
    %v294 = vpop.f32.mrf.mxu0
    %v295 = vadd.f32 %v241, %v294
    %296 = vdwg.mxu0
    %297 = vmatpush.bf16.msra.mxu0 0
    %298 = vmatpush.bf16.msra.mxu0 0
    %299 = vmatpush.bf16.msra.mxu0 0
    %300 = vmatpush.bf16.msra.mxu0 0
    %301 = vmatpush.bf16.msra.mxu0 0
    %302 = vmatpush.bf16.msra.mxu0 0
    %303 = vmatpush.bf16.msra.mxu0 %v217
    %304 = vmatpush.bf16.msra.mxu0 %v213
    %305 = vmatmul.bf16.gmra.mxu0 %v254
    %v306 = vpop.f32.mrf.mxu0
    %v307 = vadd.f32 %v226, %v306
    %v308 = vpop.f32.mrf.mxu0
    %v309 = vadd.f32 %v231, %v308
    %310 = vmatmul.bf16.gmra.mxu0 %v257
    %v311 = vpop.f32.mrf.mxu0
    %v312 = vadd.f32 %v236, %v311
    %v313 = vpop.f32.mrf.mxu0
    %v314 = vadd.f32 %v241, %v313
    %315 = vdwg.mxu0
    %316 = vmatpush.bf16.msra.mxu0 0
    %317 = vmatpush.bf16.msra.mxu0 0
    %318 = vmatpush.bf16.msra.mxu0 0
    %319 = vmatpush.bf16.msra.mxu0 0
    %320 = vmatpush.bf16.msra.mxu0 0
    %321 = vmatpush.bf16.msra.mxu0 0
    %322 = vmatpush.bf16.msra.mxu0 %v218
    %323 = vmatpush.bf16.msra.mxu0 %v214
    %324 = vmatmul.bf16.gmra.mxu0 %v254
    %v325 = vpop.f32.mrf.mxu0
    %v326 = vadd.f32 %v226, %v325
    %v327 = vpop.f32.mrf.mxu0
    %v328 = vadd.f32 %v231, %v327
    %329 = vmatmul.bf16.gmra.mxu0 %v257
    %v330 = vpop.f32.mrf.mxu0
    %v331 = vadd.f32 %v236, %v330
    %v332 = vpop.f32.mrf.mxu0
    %v333 = vadd.f32 %v241, %v332
    %334 = vdwg.mxu0
    %v335 = vmax.f32 %v269, 0.0
    %v336 = vmax.f32 %v288, 0.0
    %v337 = vmax.f32 %v307, 0.0
    %v338 = vmax.f32 %v326, 0.0
    %v339 = vmax.f32 %v271, 0.0
    %v340 = vmax.f32 %v290, 0.0
    %v341 = vmax.f32 %v309, 0.0
    %v342 = vmax.f32 %v328, 0.0
    %v343 = vmax.f32 %v274, 0.0
    %v344 = vmax.f32 %v293, 0.0
    %v345 = vmax.f32 %v312, 0.0
    %v346 = vmax.f32 %v331, 0.0
    %v347 = vmax.f32 %v276, 0.0
    %v348 = vmax.f32 %v295, 0.0
    %v349 = vmax.f32 %v314, 0.0
    %v350 = vmax.f32 %v333, 0.0
    %v351 = vld [vmem:[%s5] sm:$0x1]
    %v352 = vpack.c.bf16 %v339, %v335
    %v353 = vpack.c.bf16 %v340, %v336
    %v354 = vpack.c.bf16 %v341, %v337
    %v355 = vpack.c.bf16 %v342, %v338
    %v356 = vpack.c.bf16 %v347, %v343
    %v357 = vpack.c.bf16 %v348, %v344
    %v358 = vpack.c.bf16 %v349, %v345
    %v359 = vpack.c.bf16 %v350, %v346
    %s360 = sld [smem:[#allocation2]]
    %v361 = vstv %s360
    %v363 = vsel %vm108, %v351, 0
    %365 = vmatpush.bf16.msra.mxu0 0
    %366 = vmatpush.bf16.msra.mxu0 0
    %367 = vmatpush.bf16.msra.mxu0 0
    %368 = vmatpush.bf16.msra.mxu0 0
    %369 = vmatpush.bf16.msra.mxu0 0
    %370 = vmatpush.bf16.msra.mxu0 0
    %371 = vmatpush.bf16.msra.mxu0 %v356
    %372 = vmatpush.bf16.msra.mxu0 %v352
    %373 = vmatmul.bf16.gmra.mxu0 %v363
    %v374 = vpop.f32.mrf.mxu0
    %v375 = vadd.f32 %v361, %v374
    %v376 = vpop.f32.mrf.mxu0
    %377 = vdwg.mxu0
    %378 = vmatpush.bf16.msra.mxu0 0
    %379 = vmatpush.bf16.msra.mxu0 0
    %380 = vmatpush.bf16.msra.mxu0 0
    %381 = vmatpush.bf16.msra.mxu0 0
    %382 = vmatpush.bf16.msra.mxu0 0
    %383 = vmatpush.bf16.msra.mxu0 0
    %384 = vmatpush.bf16.msra.mxu0 %v357
    %385 = vmatpush.bf16.msra.mxu0 %v353
    %386 = vmatmul.bf16.gmra.mxu0 %v363
    %v387 = vpop.f32.mrf.mxu0
    %v388 = vadd.f32 %v361, %v387
    %v389 = vpop.f32.mrf.mxu0
    %390 = vdwg.mxu0
    %391 = vmatpush.bf16.msra.mxu0 0
    %392 = vmatpush.bf16.msra.mxu0 0
    %393 = vmatpush.bf16.msra.mxu0 0
    %394 = vmatpush.bf16.msra.mxu0 0
    %395 = vmatpush.bf16.msra.mxu0 0
    %396 = vmatpush.bf16.msra.mxu0 0
    %397 = vmatpush.bf16.msra.mxu0 %v358
    %398 = vmatpush.bf16.msra.mxu0 %v354
    %399 = vmatmul.bf16.gmra.mxu0 %v363
    %v400 = vpop.f32.mrf.mxu0
    %v401 = vadd.f32 %v361, %v400
    %v402 = vpop.f32.mrf.mxu0
    %403 = vdwg.mxu0
    %404 = vmatpush.bf16.msra.mxu0 0
    %405 = vmatpush.bf16.msra.mxu0 0
    %406 = vmatpush.bf16.msra.mxu0 0
    %407 = vmatpush.bf16.msra.mxu0 0
    %408 = vmatpush.bf16.msra.mxu0 0
    %409 = vmatpush.bf16.msra.mxu0 0
    %410 = vmatpush.bf16.msra.mxu0 %v359
    %411 = vmatpush.bf16.msra.mxu0 %v355
    %412 = vmatmul.bf16.gmra.mxu0 %v363
    %v413 = vpop.f32.mrf.mxu0
    %v414 = vadd.f32 %v361, %v413
    %v415 = vpop.f32.mrf.mxu0
    %416 = vdwg.mxu0
    %v419 = vrot.slane %v388, 7
    %vm420 = vcmask 1040384
    %v421 = vsel %vm420, %v375, %v419
    %v423 = vlaneseq
    %vm424 = vcmp.ge.s32.totalorder %v423, 0
    %vm425 = vcmp.lt.s32.totalorder %v423, 256
    %vm426 = vmand %vm424, %vm425
    %427 = vst.msk [vmem:[#allocation6] sm:$0x3] %vm426, %v421
    %v430 = vrot.slane %v414, 7
    %v431 = vsel %vm420, %v401, %v430
    %s433 = scalar_lea.vmem [#allocation6], 2
    %434 = vst.msk [vmem:[%s433] sm:$0x3] %vm426, %v431
    // Predicated region
    $region34: #{points_obj_cls_forward.1} parent=1 // pred_check
      _
    $region35: #{points_obj_cls_forward.1} parent=1 // pred_check_branch
      %436 = sbr.rel (0) target = $region37
    $region36: #{points_obj_cls_forward.1} parent=1 // pred_region
      %438 = vsyncadd [#allocation5], 0
      %s439 = sshll.u32 [#allocation6], 4
      %s440 = int_to_ptr.vmem [resolvable:$true] %s439
      %s441 = sshll.u32 %s7, 4
      %s442 = int_to_ptr.hbm [resolvable:$true] %s441
      %447 = dma.vmem_to_hbm [thread:$0]  %s440, 64, %s442, [#allocation5], 32, 32, 2
    $region37: #{points_obj_cls_forward.1} parent=1 // pred_fallthru
      _
    // Predicated region
    $region38: #{points_obj_cls_forward.1} parent=1 // pred_check
      _
    $region39: #{points_obj_cls_forward.1} parent=1 // pred_check_branch
      %449 = sbr.rel (0) target = $region41
    $region40: #{points_obj_cls_forward.1} parent=1 // pred_region
      %451 = dma.done [#allocation5], 64
    $region41: #{points_obj_cls_forward.1} parent=1 // pred_fallthru
      _
    %452 = vsyncpa [#allocation4], 1
    %453 = vsyncpa [#allocation5], 1

</llo_original>
